<compile_context>
chip_gen: v7x
topology: tpu7x:2x2x1
jax: 0.10.0
libtpu: 0.0.40
codegen_flags: <defaults>
</compile_context>

<pallas_src>
import jax
import jax.numpy as jnp
from jax.experimental import pallas as pl
from jax.experimental.pallas import tpu as pltpu


# ----------------------------- Pallas kernel --------------------------------
def _cconv_relu_kernel(w_ref, b_ref, p_ref, o_ref):
    # w_ref : (2Cout, 2K)  packed complex weights   (VMEM-resident, 1 buffer)
    # b_ref : (2Cout, 1)   packed combined biases   (VMEM-resident, 1 buffer)
    # p_ref : (2K, TM)     transposed im2col patch tile (real ; imag)
    # o_ref : (2Cout, TM)  transposed output tile (real rows ; imag rows)
    acc = jnp.dot(w_ref[...], p_ref[...], preferred_element_type=jnp.float32)
    o_ref[...] = jnp.maximum(acc + b_ref[...], 0.0)          # complex_relu


# ------------------------- tiling / VMEM budgeting ---------------------------
def _round_up(x, m):
    return ((x + m - 1) // m) * m


def _choose_tm(m_pad, two_k, bytes_per_elem, target_bytes):
    """Pick an M tile: a multiple of 128 that divides m_pad.

    Big enough that the per-step patch DMA is ~target_bytes (amortizes the
    ~0.35us per-grid-step overhead), small enough to keep >= 2 grid steps when
    possible (so the "parallel" M axis can use both v7x TensorCores) and capped
    at 8192 lanes so per-tile VMEM stays in single-digit MiB on all generations.
    """
    q = m_pad // 128
    tm_target = target_bytes // max(1, two_k * bytes_per_elem)
    tm_target = int(min(8192, max(512, tm_target)))
    tm_target = max(128, (tm_target // 128) * 128)
    g = max(1, -(-m_pad // tm_target))          # ceil-div: desired grid steps
    if q >= 2:
        g = max(g, 2)                           # keep both v7x TCs busy
    while q % g:                                # make g a divisor of q
        g += 1
    return m_pad // g


def _vmem_limit_bytes(two_cout, two_k, tm, patch_bpe):
    """Scoped-VMEM budget derived from the actual block sizes (2x slack).

    v5e's scoped default is only 16 MiB (of 128 physical); v7x has 64 MiB/TC
    total, so never request more than 48 MiB.
    """
    w = two_cout * two_k * patch_bpe            # weights, single buffer
    b = two_cout * 128 * 4                      # bias (lane-padded), single buf
    p = two_k * tm * patch_bpe * 3              # patch stream, 3-deep pipeline
    o = two_cout * tm * 4 * 2                   # f32 output, double buffered
    est = w + b + p + o
    return int(min(48 * 2**20, max(8 * 2**20, 2 * est + (2 << 20))))


def _make_specs(two_cout, two_k, tm, use_buffer_hints):
    def hint(n):
        return dict(pipeline_mode=pl.Buffered(n)) if use_buffer_hints else {}
    in_specs = [
        # Weights/bias: constant index_map -> VMEM-resident; 1 buffer is enough.
        pl.BlockSpec((two_cout, two_k), lambda i: (0, 0), **hint(1)),
        pl.BlockSpec((two_cout, 1), lambda i: (0, 0), **hint(1)),
        # Patch stream tiled over M; 3-deep pipeline hides DMA behind tiny compute.
        pl.BlockSpec((two_k, tm), lambda i: (0, i), **hint(3)),
    ]
    out_spec = pl.BlockSpec((two_cout, tm), lambda i: (0, i))
    return in_specs, out_spec


def _cconv_relu_pallas(w_big, b_big, p_t, *, tm):
    two_cout, two_k = w_big.shape
    _, m_pad = p_t.shape
    patch_bpe = jnp.dtype(p_t.dtype).itemsize
    vmem_limit = _vmem_limit_bytes(two_cout, two_k, tm, patch_bpe)

    def build(use_buffer_hints):
        in_specs, out_spec = _make_specs(two_cout, two_k, tm, use_buffer_hints)
        return pl.pallas_call(
            _cconv_relu_kernel,
            out_shape=jax.ShapeDtypeStruct((two_cout, m_pad), jnp.float32),
            grid_spec=pltpu.PrefetchScalarGridSpec(
                num_scalar_prefetch=0,
                grid=(m_pad // tm,),
                in_specs=in_specs,
                out_specs=out_spec,
            ),
            compiler_params=pltpu.CompilerParams(
                dimension_semantics=("parallel",),   # shard M across TCs (v7x)
                vmem_limit_bytes=vmem_limit,
            ),
        )

    try:
        return build(True)(w_big, b_big, p_t)
    except Exception:
        # Conservative guard: if pipeline_mode buffer hints are rejected by this
        # jax/Mosaic version, fall back to the default (previously validated)
        # double-buffered pipeline. Math is identical.
        return build(False)(w_big, b_big, p_t)


# ------------------------------- glue (JAX) ---------------------------------
def _im2col_t_ri(x_ri_nhwc, *, m_pad, out_dtype, k=3, stride=2, pad=1):
    """(2, N, H, W, C) stacked re/im -> transposed patches (2*k*k*C, m_pad).

    Row index = reim*(k*k*C) + (kh*k + kw)*C + c ; column = (n, ho, wo) flat.
    The <=127-column zero pad to m_pad is fused into the same construction.
    """
    _, N, H, W, C = x_ri_nhwc.shape
    xp = jnp.pad(x_ri_nhwc, ((0, 0), (0, 0), (pad, pad), (pad, pad), (0, 0)))
    Ho = (H + 2 * pad - k) // stride + 1
    Wo = (W + 2 * pad - k) // stride + 1
    taps = []
    for di in range(k):
        for dj in range(k):
            taps.append(xp[:, :, di:di + stride * Ho:stride,
                           dj:dj + stride * Wo:stride, :])
    p = jnp.stack(taps, axis=0)                       # (k*k, 2, N, Ho, Wo, C)
    p = p.transpose(1, 0, 5, 2, 3, 4)                 # (2, k*k, C, N, Ho, Wo)
    p = p.reshape(2 * k * k * C, N * Ho * Wo)
    M = N * Ho * Wo
    if m_pad > M:
        p = jnp.pad(p, ((0, 0), (0, m_pad - M)))      # tiny lane-quantum pad
    return p.astype(out_dtype), Ho, Wo


def cdown_forward(x_complex_nchw, params, *, compute_dtype=jnp.bfloat16,
                  target_tile_bytes=2 * 1024 * 1024):
    """x: (N, Cin, H, W) complex64 -> (N, Cout, Ho, Wo) complex64."""
    wr, wi, br, bi = params          # wr/wi: (Cout, Cin, 3, 3); br/bi: (Cout,)
    N, Cin, H, W = x_complex_nchw.shape
    Cout = wr.shape[0]
    K = 9 * Cin

    # Real/imag deinterleave + NCHW->NHWC once, stacked so im2col is one pass.
    x_ri = jnp.stack([jnp.real(x_complex_nchw), jnp.imag(x_complex_nchw)], 0)
    x_ri = x_ri.astype(jnp.float32).transpose(0, 1, 3, 4, 2)      # (2,N,H,W,C)

    Ho = (H + 2 - 3) // 2 + 1
    Wo = (W + 2 - 3) // 2 + 1
    M = N * Ho * Wo
    m_pad = _round_up(M, 128)        # pad only to the lane quantum, not to TM

    p_t, Ho, Wo = _im2col_t_ri(x_ri, m_pad=m_pad, out_dtype=compute_dtype)

    # Pack complex weights: (Cout,Cin,kh,kw) -> (Cout,kh,kw,Cin) -> (Cout,K)
    wr_m = wr.transpose(0, 2, 3, 1).reshape(Cout, K).astype(jnp.float32)
    wi_m = wi.transpose(0, 2, 3, 1).reshape(Cout, K).astype(jnp.float32)
    w_big = jnp.concatenate(
        [jnp.concatenate([wr_m, -wi_m], axis=1),     # real output rows
         jnp.concatenate([wi_m,  wr_m], axis=1)],    # imag output rows
        axis=0).astype(compute_dtype)                # (2Cout, 2K)
    b_big = jnp.concatenate([br - bi, br + bi]).reshape(2 * Cout, 1)
    b_big = b_big.astype(jnp.float32)                # bias/relu stay in f32

    tm = _choose_tm(m_pad, 2 * K, jnp.dtype(compute_dtype).itemsize,
                    target_tile_bytes)
    out_t = _cconv_relu_pallas(w_big, b_big, p_t, tm=tm)   # (2Cout, m_pad) f32

    out_t = out_t[:, :M].reshape(2, Cout, N, Ho, Wo)
    out_r = out_t[0].transpose(1, 0, 2, 3)                 # NCHW
    out_i = out_t[1].transpose(1, 0, 2, 3)
    return jax.lax.complex(out_r, out_i)                   # complex64


# ------------------------------ reference -----------------------------------
def _conv_ref(x_nhwc, w_oihw, b):
    w_hwio = w_oihw.transpose(2, 3, 1, 0)
    out = jax.lax.conv_general_dilated(
        x_nhwc, w_hwio, window_strides=(2, 2), padding=((1, 1), (1, 1)),
        dimension_numbers=("NHWC", "HWIO", "NHWC"))
    return out + b.reshape(1, 1, 1, -1)


def cdown_reference(x_complex_nchw, params):
    wr, wi, br, bi = params
    xr = jnp.real(x_complex_nchw).astype(jnp.float32).transpose(0, 2, 3, 1)
    xi = jnp.imag(x_complex_nchw).astype(jnp.float32).transpose(0, 2, 3, 1)
    re = _conv_ref(xr, wr, br) - _conv_ref(xi, wi, bi)
    im = _conv_ref(xi, wr, br) + _conv_ref(xr, wi, bi)
    re = jnp.maximum(re, 0.0).transpose(0, 3, 1, 2)
    im = jnp.maximum(im, 0.0).transpose(0, 3, 1, 2)
    return (re + 1j * im).astype(jnp.complex64)


# --------------------------------- main --------------------------------------
if __name__ == "__main__":
    key = jax.random.PRNGKey(0)
    k_xr, k_xi, k_wr, k_wi, k_br, k_bi = jax.random.split(key, 6)

    N, Cin, Cout, H, W = 2, 4, 8, 16, 16

    x = (jax.random.normal(k_xr, (N, Cin, H, W), jnp.float32)
         + 1j * jax.random.normal(k_xi, (N, Cin, H, W), jnp.float32)
         ).astype(jnp.complex64)

    fan_in = Cin * 3 * 3
    scale = 1.0 / (fan_in ** 0.5)
    params = (
        scale * jax.random.normal(k_wr, (Cout, Cin, 3, 3), jnp.float32),
        scale * jax.random.normal(k_wi, (Cout, Cin, 3, 3), jnp.float32),
        scale * jax.random.normal(k_br, (Cout,), jnp.float32),
        scale * jax.random.normal(k_bi, (Cout,), jnp.float32),
    )

    ref = jax.block_until_ready(cdown_reference(x, params))

    # 1) float32 path: bitwise-close to the lax.conv reference.
    out_f32 = jax.block_until_ready(
        cdown_forward(x, params, compute_dtype=jnp.float32))
    assert out_f32.shape == (N, Cout, H // 2, W // 2)
    assert out_f32.dtype == jnp.complex64
    assert jnp.allclose(jnp.real(out_f32), jnp.real(ref), atol=1e-4, rtol=1e-4)
    assert jnp.allclose(jnp.imag(out_f32), jnp.imag(ref), atol=1e-4, rtol=1e-4)

    # 2) default bf16 patch/weight stream (f32 accumulation): looser tolerance
    #    reflects bf16 input rounding only.
    out_bf16 = jax.block_until_ready(cdown_forward(x, params))
    assert out_bf16.shape == (N, Cout, H // 2, W // 2)
    assert out_bf16.dtype == jnp.complex64
    assert jnp.allclose(jnp.real(out_bf16), jnp.real(ref), atol=5e-2, rtol=5e-2)
    assert jnp.allclose(jnp.imag(out_bf16), jnp.imag(ref), atol=5e-2, rtol=5e-2)

    print("KERNEL_OK")
</pallas_src>

<mosaic_0001>
module attributes {stable_mosaic.version = 11 : i64} {
  func.func @_cconv_relu_kernel(%arg0: i32, %arg1: memref<16x72xf32, #tpu.memory_space<vmem>>, %arg2: memref<16x1xf32, #tpu.memory_space<vmem>>, %arg3: memref<72x128xf32, #tpu.memory_space<vmem>>, %arg4: memref<16x128xf32, #tpu.memory_space<vmem>>) attributes {dimension_semantics = [#tpu.dimension_semantics<parallel>], iteration_bounds = array<i64: 1>, scalar_prefetch = 0 : i64, scratch_operands = 0 : i64, tpu.core_type = #tpu.core_type<tc>, window_params = [{pipeline_mode = #tpu.pipeline_mode<synchronous>, transform_indices = @transform_0, window_bounds = array<i64: 16, 72>}, {pipeline_mode = #tpu.pipeline_mode<synchronous>, transform_indices = @transform_1, window_bounds = array<i64: 16, 1>}, {transform_indices = @transform_2, window_bounds = array<i64: 72, 128>}, {transform_indices = @transform_3, window_bounds = array<i64: 16, 128>}]} {
    %c0 = arith.constant 0 : index
    %c0_0 = arith.constant 0 : index
    %0 = vector.load %arg1[%c0, %c0_0] : memref<16x72xf32, #tpu.memory_space<vmem>>, vector<16x72xf32>
    %c0_1 = arith.constant 0 : index
    %c0_2 = arith.constant 0 : index
    %1 = vector.load %arg3[%c0_1, %c0_2] : memref<72x128xf32, #tpu.memory_space<vmem>>, vector<72x128xf32>
    %cst = arith.constant dense<0.000000e+00> : vector<16x128xf32>
    %2 = tpu.matmul %0, %1, %cst {dimension_numbers = #tpu.dot_dimension_numbers<[1], [0], [0], [1], [0, 0, 1, 1], [], []>} : vector<16x72xf32>, vector<72x128xf32>, vector<16x128xf32> -> vector<16x128xf32>
    %c0_3 = arith.constant 0 : index
    %c0_4 = arith.constant 0 : index
    %3 = vector.load %arg2[%c0_3, %c0_4] : memref<16x1xf32, #tpu.memory_space<vmem>>, vector<16x1xf32>
    %4 = vector.broadcast %3 : vector<16x1xf32> to vector<16x128xf32>
    %5 = arith.addf %2, %4 : vector<16x128xf32>
    %cst_5 = arith.constant 0.000000e+00 : f32
    %6 = vector.broadcast %cst_5 : f32 to vector<16x128xf32>
    %7 = arith.maximumf %5, %6 : vector<16x128xf32>
    %c0_6 = arith.constant 0 : index
    %c0_7 = arith.constant 0 : index
    %8 = vector.load %arg4[%c0_6, %c0_7] : memref<16x128xf32, #tpu.memory_space<vmem>>, vector<16x128xf32>
    tpu.vector_store %arg4[%c0_6, %c0_7], %7 {strides = array<i32>} : memref<16x128xf32, #tpu.memory_space<vmem>>, vector<16x128xf32>,
    return
  }
  func.func @transform_0(%arg0: i32) -> (i32, i32) {
    %c0_i32 = arith.constant 0 : i32
    %c0_i32_0 = arith.constant 0 : i32
    %c0_i32_1 = arith.constant 0 : i32
    return %c0_i32, %c0_i32_0 : i32, i32
  }
  func.func @transform_1(%arg0: i32) -> (i32, i32) {
    %c0_i32 = arith.constant 0 : i32
    %c0_i32_0 = arith.constant 0 : i32
    %c0_i32_1 = arith.constant 0 : i32
    return %c0_i32, %c0_i32_0 : i32, i32
  }
  func.func @transform_2(%arg0: i32) -> (i32, i32) {
    %c0_i32 = arith.constant 0 : i32
    %c0_i32_0 = arith.constant 0 : i32
    return %c0_i32, %arg0 : i32, i32
  }
  func.func @transform_3(%arg0: i32) -> (i32, i32) {
    %c0_i32 = arith.constant 0 : i32
    %c0_i32_0 = arith.constant 0 : i32
    return %c0_i32, %arg0 : i32, i32
  }
}

</mosaic_0001>

<llo_original>
// kernel: tpu_custom_call.1
$region0: #{tpu_custom_call.1}
  #allocation0 [shape = 'u32[]', space=smem, size = 0x4, offset = 0x4, fixed_abs, tag = 'smem constant byte address 0x4 - core index']
  #allocation1 [shape = 'u32[144,128]{1,0:T(1,128)}', space=vmem, size = 0x12000, scoped, tag = 'internal scratch']
  %s0 = inlined_call_operand.vmem [shape: f32[16,72], index: 0, kind: input, shape index: {}]
  %s1 = inlined_call_operand.vmem [shape: f32[16,1], index: 1, kind: input, shape index: {}]
  %s2 = inlined_call_operand.hbm [shape: f32[72,128], index: 2, kind: input, shape index: {}]
  %s3 = inlined_call_operand.hbm [shape: f32[16,128], index: 3, kind: output, shape index: {}]
  %s4 = sld [smem:[#allocation0]]
  $region26: #{tpu_custom_call.1} parent=0
    _
  %s6 = ssub.s32 1, %s4
  %s7 = scalar_select 0, %s6, %s4
  $region1: #{tpu_custom_call.1} parent=0
    #allocation2 [shape = 'u8[36864]{0}', space=vmem, size = 0x9000, scoped, tag = 'input window, operand 2, single buffered']
    #allocation3 [shape = 's32[1]{0}', space=sflag, size = 0x4, scoped, tag = 'scoped memory for tpu_custom_call.1']
    #allocation4 [shape = 's32[1]{0}', space=sflag, size = 0x4, scoped, tag = 'scoped memory for tpu_custom_call.1']
    #allocation5 [shape = 'u8[8192]{0}', space=vmem, size = 0x2000, scoped, tag = 'output window, operand 0, single buffered']
    %8 = vsyncpa [#allocation3], 0
    %9 = vsyncpa [#allocation4], 0
    // Predicated region
    $region2: #{tpu_custom_call.1} parent=1 // pred_check
      _
    $region3: #{tpu_custom_call.1} parent=1 // pred_check_branch
      %11 = sbr.rel (0) target = $region5
    $region4: #{tpu_custom_call.1} parent=1 // pred_region
      _
    $region5: #{tpu_custom_call.1} parent=1 // pred_fallthru
      _
    // Predicated region
    $region6: #{tpu_custom_call.1} parent=1 // pred_check
      _
    $region7: #{tpu_custom_call.1} parent=1 // pred_check_branch
      %13 = sbr.rel (0) target = $region9
    $region8: #{tpu_custom_call.1} parent=1 // pred_region
      _
    $region9: #{tpu_custom_call.1} parent=1 // pred_fallthru
      _
    // Predicated region
    $region10: #{tpu_custom_call.1} parent=1 // pred_check
      _
    $region11: #{tpu_custom_call.1} parent=1 // pred_check_branch
      %15 = sbr.rel (0) target = $region13
    $region12: #{tpu_custom_call.1} parent=1 // pred_region
      %s17 = ssub.s32 1152, 1152
      %18 = vsyncadd [#allocation3], %s17
      %s19 = sshll.u32 [#allocation2], 4
      %s20 = int_to_ptr.vmem [resolvable:$true] %s19
      %25 = dma.hbm_to_vmem [thread:$0]  %s2, 1152, %s20, [#allocation3], 128, 128, 8
    $region13: #{tpu_custom_call.1} parent=1 // pred_fallthru
      _
    // Predicated region
    $region14: #{tpu_custom_call.1} parent=1 // pred_check
      _
    $region15: #{tpu_custom_call.1} parent=1 // pred_check_branch
      %27 = sbr.rel (0) target = $region17
    $region16: #{tpu_custom_call.1} parent=1 // pred_region
      %28 = dma.done [#allocation3], 1152
    $region17: #{tpu_custom_call.1} parent=1 // pred_fallthru
      _
    %v29 = vld [vmem:[%s0] sm:$0xff]
    %v30 = vld [vmem:[%s0 + $0x8] sm:$0xff]
    %v31 = vld [vmem:[#allocation2] sm:$0xff]
    %v32 = vld [vmem:[#allocation2 + $0x8] sm:$0xff]
    %v33 = vld [vmem:[#allocation2 + $0x10] sm:$0xff]
    %v34 = vld [vmem:[#allocation2 + $0x18] sm:$0xff]
    %v35 = vld [vmem:[#allocation2 + $0x20] sm:$0xff]
    %v36 = vld [vmem:[#allocation2 + $0x28] sm:$0xff]
    %v37 = vld [vmem:[#allocation2 + $0x30] sm:$0xff]
    %v38 = vld [vmem:[#allocation2 + $0x38] sm:$0xff]
    %v39 = vld [vmem:[#allocation2 + $0x40] sm:$0xff]
    %v40 = vld [vmem:[%s1] sm:$0xff]
    %v41 = vld [vmem:[%s1 + $0x8] sm:$0xff]
    %43 = vset.pattern.permute.xlu0 0
    %44 = vperm.xlu0 %43, %v40
    %v45 = vpop.permute.xlu0 %44
    %48 = vset.pattern.permute.xlu0 0
    %49 = vperm.xlu0 %48, %v41
    %v50 = vpop.permute.xlu0 %49
    %vm52 = vcmask 588800
    %v54 = vsel %vm52, %v29, 0
    %v57 = vsel %vm52, %v30, 0
    %59 = vmatprep.subr.mxu0 0.0
    %60 = vmatpush1.msra.mxu0 %v31
    %61 = vmatprep.subr.mxu0 0.0
    %62 = vmatpush1.msra.mxu0 %v32
    %63 = vmatprep.subr.mxu0 0.0
    %64 = vmatpush1.msra.mxu0 %v33
    %65 = vmatprep.subr.mxu0 0.0
    %66 = vmatpush1.msra.mxu0 %v34
    %67 = vmatprep.subr.mxu0 0.0
    %68 = vmatpush1.msra.mxu0 %v35
    %69 = vmatprep.subr.mxu0 0.0
    %70 = vmatpush1.msra.mxu0 %v36
    %71 = vmatprep.subr.mxu0 0.0
    %72 = vmatpush1.msra.mxu0 %v37
    %73 = vmatprep.subr.mxu0 0.0
    %74 = vmatpush1.msra.mxu0 %v38
    %75 = vmatprep.subr.mxu0 0.0
    %76 = vmatpush1.msra.mxu0 %v39
    %77 = vmatprep.subr.mxu0 0.0
    %78 = vmatpush1.msra.mxu0 0.0
    %79 = vmatprep.subr.mxu0 0.0
    %80 = vmatpush1.msra.mxu0 0.0
    %81 = vmatprep.subr.mxu0 0.0
    %82 = vmatpush1.msra.mxu0 0.0
    %83 = vmatprep.subr.mxu0 0.0
    %84 = vmatpush1.msra.mxu0 0.0
    %85 = vmatprep.subr.mxu0 0.0
    %86 = vmatpush1.msra.mxu0 0.0
    %87 = vmatprep.subr.mxu0 0.0
    %88 = vmatpush1.msra.mxu0 0.0
    %89 = vmatprep.subr.mxu0 0.0
    %90 = vmatpush1.msra.mxu0 0.0
    %91 = vmatprep.subr.mxu0 0.0
    %92 = vmatpush1.msra.mxu0 0.0
    %93 = vmatprep.subr.mxu0 0.0
    %94 = vmatpush1.msra.mxu0 0.0
    %95 = vmatprep.subr.mxu0 0.0
    %96 = vmatpush1.msra.mxu0 0.0
    %97 = vmatprep.subr.mxu0 0.0
    %98 = vmatpush1.msra.mxu0 0.0
    %99 = vmatprep.subr.mxu0 0.0
    %100 = vmatpush1.msra.mxu0 0.0
    %101 = vmatprep.subr.mxu0 0.0
    %102 = vmatpush1.msra.mxu0 0.0
    %103 = vmatprep.subr.mxu0 0.0
    %104 = vmatpush1.msra.mxu0 0.0
    %105 = vmatprep.subr.mxu0 0.0
    %106 = vmatpush1.msra.mxu0 0.0
    %107 = vmatprep.subr.mxu0 0.0
    %108 = vmatpush1.msra.mxu0 0.0
    %109 = vmatprep.subr.mxu0 0.0
    %110 = vmatpush1.msra.mxu0 0.0
    %111 = vmatprep.subr.mxu0 0.0
    %112 = vmatpush1.msra.mxu0 0.0
    %113 = vmatprep.subr.mxu0 0.0
    %114 = vmatpush1.msra.mxu0 0.0
    %115 = vmatprep.subr.mxu0 0.0
    %116 = vmatpush1.msra.mxu0 0.0
    %117 = vmatprep.subr.mxu0 0.0
    %118 = vmatpush1.msra.mxu0 0.0
    %119 = vmatprep.subr.mxu0 0.0
    %120 = vmatpush1.msra.mxu0 0.0
    %121 = vmatprep.subr.mxu0 0.0
    %122 = vmatpush1.msra.mxu0 0.0
    %123 = vmatprep.mubr.f32.mxu0 0.0
    %124 = vmatmul.mubr.f32.gmra.mrb[0].mxu0 %v54
    %v125 = vpop.f32.mrb[0].mxu0
    %v126 = vadd.f32 %v45, %v125
    %v127 = vpop.f32.mrb[0].mxu0
    %128 = vmatprep.mubr.f32.mxu0 0.0
    %129 = vmatmul.mubr.f32.gmra.mrb[0].mxu0 %v57
    %v130 = vpop.f32.mrb[0].mxu0
    %v131 = vadd.f32 %v50, %v130
    %v132 = vpop.f32.mrb[0].mxu0
    %133 = vdwg.mxu0
    %v134 = vmax.f32 %v126, 0.0
    %v135 = vmax.f32 %v131, 0.0
    %136 = vst [vmem:[#allocation5] sm:$0xff] %v134
    %137 = vst [vmem:[#allocation5 + $0x8] sm:$0xff] %v135
    // Predicated region
    $region18: #{tpu_custom_call.1} parent=1 // pred_check
      _
    $region19: #{tpu_custom_call.1} parent=1 // pred_check_branch
      %139 = sbr.rel (0) target = $region21
    $region20: #{tpu_custom_call.1} parent=1 // pred_region
      %s141 = ssub.s32 256, 256
      %142 = vsyncadd [#allocation4], %s141
      %s143 = sshll.u32 [#allocation5], 4
      %s144 = int_to_ptr.vmem [resolvable:$true] %s143
      %149 = dma.vmem_to_hbm [thread:$0]  %s144, 256, %s3, [#allocation4], 128, 128, 8
    $region21: #{tpu_custom_call.1} parent=1 // pred_fallthru
      _
    // Predicated region
    $region22: #{tpu_custom_call.1} parent=1 // pred_check
      _
    $region23: #{tpu_custom_call.1} parent=1 // pred_check_branch
      %151 = sbr.rel (0) target = $region25
    $region24: #{tpu_custom_call.1} parent=1 // pred_region
      %152 = dma.done [#allocation4], 256
    $region25: #{tpu_custom_call.1} parent=1 // pred_fallthru
      _
    %153 = vsyncpa [#allocation3], 1
    %154 = vsyncpa [#allocation4], 1

</llo_original>
